<compile_context>
chip_gen: v6e
topology: v6e:2x2x1
jax: 0.10.0
libtpu: 0.0.40
codegen_flags: <defaults>
</compile_context>

<pallas_src>
import jax
import jax.numpy as jnp
from jax.experimental import pallas as pl
from jax.experimental.pallas import tpu as pltpu

EPS = 1e-5


def _sublane_multiple(dtype):
    """Sublane tile multiple for the packed dtype: 8 f32 / 16 bf16 / 32 int8."""
    itemsize = jnp.dtype(dtype).itemsize
    return max(8, 32 // max(1, itemsize))


def _choose_bt(Bp, row_bytes, sub, target_bytes):
    """Batch-fold factor: biggest block <= ~target, preferring >=2 grid steps.

    Bp is a multiple of `sub`, so every candidate keeps the block's
    second-to-last dim a legal (dtype-aware) sublane multiple.  Preferring
    >=2 grid steps lets the "parallel" grid axis shard across v7x's two
    TensorCores and gives the pipeline something to overlap.
    """
    cands = [d for d in range(sub, Bp + 1, sub) if Bp % d == 0]
    fitting = [d for d in cands if d * row_bytes <= target_bytes]
    if not fitting:
        return cands[0]            # even a single sub-row stripe exceeds target
    multi = [d for d in fitting if Bp // d >= 2]
    return max(multi) if multi else max(fitting)


def _make_acn_kernel(C, HW, HWp):
    need_mask = HWp != HW

    def acn_kernel(w_ref, b_ref, x_ref, o_ref):
        # w_ref: (2*C,) f32 SMEM; b_ref: (2,) f32 SMEM (scalar prefetch).
        # x_ref / o_ref: (bt, C*HWp) VMEM blocks; channel c occupies lanes
        # [c*HWp, (c+1)*HWp), folded batches occupy the sublanes.
        wl = [w_ref[c] for c in range(C)]          # hoisted SMEM scalar reads
        wg = [w_ref[C + c] for c in range(C)]
        b_l = b_ref[0]
        b_g = b_ref[1]

        def chan(c):
            return x_ref[:, c * HWp:(c + 1) * HWp].astype(jnp.float32)

        # 1x1-conv logits as VPU broadcast-FMAs, vectorized over the folded
        # batches.  Two interleaved accumulator chains hide VALU latency when
        # C grows (free at C=4).
        l_acc = [None, None]
        g_acc = [None, None]
        for c in range(C):
            xc = chan(c)
            k = c & 1
            tl = xc * wl[c]
            tg = xc * wg[c]
            l_acc[k] = tl if l_acc[k] is None else l_acc[k] + tl
            g_acc[k] = tg if g_acc[k] is None else g_acc[k] + tg
        l_logit = (l_acc[0] if l_acc[1] is None else l_acc[0] + l_acc[1]) + b_l
        g_logit = (g_acc[0] if g_acc[1] is None else g_acc[0] + g_acc[1]) + b_g

        # Attention weights.  The softmax denominator cancels against the
        # final a / sum(a) renormalization, so only the shifted exp is kept.
        a_l = jax.nn.sigmoid(l_logit)                        # (bt, HWp)
        if need_mask:
            lane = jax.lax.broadcasted_iota(jnp.int32, (1, HWp), 1)
            mask = lane < HW
            g_for_max = jnp.where(mask, g_logit, -jnp.inf)
        else:
            g_for_max = g_logit
        g_max = jnp.max(g_for_max, axis=-1, keepdims=True)   # (bt, 1)
        a_raw = a_l * jnp.exp(g_logit - g_max)               # unnormalized a
        if need_mask:
            a_raw = jnp.where(mask, a_raw, 0.0)              # drop padded lanes

        s1 = jnp.sum(a_raw, axis=-1, keepdims=True)          # (bt, 1)
        inv_s1 = pl.reciprocal(s1, approx=False)             # tiny; keep exact

        # Per-(batch, channel) weighted mean / variance and normalization.
        # Exact sum(a*(x-mean)^2) variance: matches the reference numerics and
        # avoids E[x^2]-mean^2 catastrophic cancellation.
        for c in range(C):
            xc = chan(c)
            sx = jnp.sum(a_raw * xc, axis=-1, keepdims=True)       # (bt, 1)
            mean = sx * inv_s1
            xcm = xc - mean
            var = jnp.sum(a_raw * xcm * xcm, axis=-1, keepdims=True) * inv_s1
            inv_std = jax.lax.rsqrt(jnp.maximum(var, 0.0) + EPS)   # EUP rsqrt
            o_ref[:, c * HWp:(c + 1) * HWp] = (xcm * inv_std).astype(o_ref.dtype)

    return acn_kernel


def acn_forward(x, w, b):
    """x: (B, C, H, W) or (B, C, H); w: (2, C); b: (2,)."""
    if x.ndim == 3:
        x = x[..., None]
    assert x.ndim == 4, "Illegal x"
    B, C, H, W = x.shape
    HW = H * W
    itemsize = jnp.dtype(x.dtype).itemsize
    sub = _sublane_multiple(x.dtype)              # dtype-aware sublane rule
    HWp = ((HW + 127) // 128) * 128
    Bp = ((B + sub - 1) // sub) * sub

    # (B, C, HW) -> pad HW lanes -> (Bp, C*HWp).  Zero-padded rows/lanes are
    # masked in-kernel or sliced off afterwards and cannot produce NaN/Inf.
    x3 = x.reshape(B, C, HW)
    if HWp != HW:
        x3 = jnp.pad(x3, ((0, 0), (0, 0), (0, HWp - HW)))
    x2 = x3.reshape(B, C * HWp)
    if Bp != B:
        x2 = jnp.pad(x2, ((0, Bp - B), (0, 0)))

    w_flat = w.reshape(2 * C).astype(jnp.float32)
    bias = b.reshape(2).astype(jnp.float32)

    # Block sizing: ~MiB-scale x-blocks, bounded so 2x(in+out) buffers plus the
    # f32 working set stay well under v7x's 64 MiB physical VMEM.
    row_bytes = C * HWp * itemsize
    budget = 28 << 20
    denom = 4.0 + 48.0 / (C * itemsize)           # blocks + ~12 f32 work rows
    target = min(4 << 20, int(budget / denom))
    bt = _choose_bt(Bp, row_bytes, sub, target)
    num_steps = Bp // bt

    # TODO(synk): for very large C*HW (whole-HW block no longer fits v7x's
    # 64 MiB VMEM) add a two-pass HW-tiled variant (online stats, then
    # normalize); the whole-HW block is fine for the shapes this module uses.
    block_bytes = bt * row_bytes
    f32_row = bt * HWp * 4
    needed = 4 * block_bytes + 12 * f32_row + (8 << 20)
    try:
        vmem_cap = pltpu.get_tpu_info().vmem_capacity_bytes
    except Exception:                              # info unavailable: assume v7x
        vmem_cap = 64 << 20
    vmem_limit = int(min(max(needed, 16 << 20), 0.9 * vmem_cap))

    out = pl.pallas_call(
        _make_acn_kernel(C, HW, HWp),
        out_shape=jax.ShapeDtypeStruct((Bp, C * HWp), x.dtype),
        grid_spec=pltpu.PrefetchScalarGridSpec(
            num_scalar_prefetch=2,                 # w_flat, bias -> SMEM scalars
            grid=(num_steps,),
            in_specs=[
                pl.BlockSpec((bt, C * HWp), lambda i, w_s, b_s: (i, 0)),
            ],
            out_specs=pl.BlockSpec((bt, C * HWp), lambda i, w_s, b_s: (i, 0)),
        ),
        compiler_params=pltpu.CompilerParams(
            dimension_semantics=("parallel",),
            vmem_limit_bytes=vmem_limit,
        ),
    )(w_flat, bias, x2)

    out = out[:B].reshape(B, C, HWp)[:, :, :HW]
    return out.reshape(B, C, H, W)


def acn_ref(x, w, b):
    """Pure-JAX reference mirroring the PyTorch forward."""
    att = jnp.einsum("kc,bchw->bkhw", w, x) + b.reshape(1, 2, 1, 1)
    l_logit = att[:, :1]
    g_logit = att[:, 1:2]
    a_l = jax.nn.sigmoid(l_logit)
    B, _, H, W = g_logit.shape
    a_g = jax.nn.softmax(g_logit.reshape(B, 1, H * W), axis=2).reshape(B, 1, H, W)
    a = a_l * a_g
    a = a / jnp.sum(a, axis=(2, 3), keepdims=True)
    mean = jnp.sum(x * a, axis=(2, 3), keepdims=True)
    out = x - mean
    std = jnp.sqrt(jnp.sum(a * out ** 2, axis=(2, 3), keepdims=True) + EPS)
    return out / std


if __name__ == "__main__":
    B, C, H, W = 2, 4, 16, 16   # inc = C = 4

    key = jax.random.PRNGKey(0)
    kx, kw, kb = jax.random.split(key, 3)

    x = jax.random.normal(kx, (B, C, H, W), dtype=jnp.float32)
    # Deterministic synthetic init for the 1x1 conv (out_ch=2, in_ch=C).
    w = jax.random.normal(kw, (2, C), dtype=jnp.float32) * 0.5
    b = jax.random.normal(kb, (2,), dtype=jnp.float32) * 0.1

    out = acn_forward(x, w, b)
    out = jax.block_until_ready(out)

    ref = acn_ref(x, w, b)
    assert out.shape == (B, C, H, W)
    assert jnp.allclose(out, ref, atol=1e-4, rtol=1e-4), "mismatch vs reference"

    print("KERNEL_OK")
</pallas_src>

<mosaic_0001>
module attributes {stable_mosaic.version = 11 : i64} {
  func.func @acn_kernel(%arg0: i32, %arg1: memref<8xf32, #tpu.memory_space<smem>>, %arg2: memref<2xf32, #tpu.memory_space<smem>>, %arg3: memref<8x1024xf32, #tpu.memory_space<vmem>>, %arg4: memref<8x1024xf32, #tpu.memory_space<vmem>>) attributes {dimension_semantics = [#tpu.dimension_semantics<parallel>], iteration_bounds = array<i64: 1>, scalar_prefetch = 2 : i64, scratch_operands = 0 : i64, tpu.core_type = #tpu.core_type<tc>, window_params = [{transform_indices = @transform_0, window_bounds = array<i64: 8, 1024>}, {transform_indices = @transform_1, window_bounds = array<i64: 8, 1024>}]} {
    %c0 = arith.constant 0 : index
    %0 = memref.load %arg1[%c0] : memref<8xf32, #tpu.memory_space<smem>>
    %c1 = arith.constant 1 : index
    %1 = memref.load %arg1[%c1] : memref<8xf32, #tpu.memory_space<smem>>
    %c2 = arith.constant 2 : index
    %2 = memref.load %arg1[%c2] : memref<8xf32, #tpu.memory_space<smem>>
    %c3 = arith.constant 3 : index
    %3 = memref.load %arg1[%c3] : memref<8xf32, #tpu.memory_space<smem>>
    %c4 = arith.constant 4 : index
    %4 = memref.load %arg1[%c4] : memref<8xf32, #tpu.memory_space<smem>>
    %c5 = arith.constant 5 : index
    %5 = memref.load %arg1[%c5] : memref<8xf32, #tpu.memory_space<smem>>
    %c6 = arith.constant 6 : index
    %6 = memref.load %arg1[%c6] : memref<8xf32, #tpu.memory_space<smem>>
    %c7 = arith.constant 7 : index
    %7 = memref.load %arg1[%c7] : memref<8xf32, #tpu.memory_space<smem>>
    %c0_0 = arith.constant 0 : index
    %8 = memref.load %arg2[%c0_0] : memref<2xf32, #tpu.memory_space<smem>>
    %c1_1 = arith.constant 1 : index
    %9 = memref.load %arg2[%c1_1] : memref<2xf32, #tpu.memory_space<smem>>
    %c0_2 = arith.constant 0 : index
    %c0_3 = arith.constant 0 : index
    %10 = vector.load %arg3[%c0_2, %c0_3] : memref<8x1024xf32, #tpu.memory_space<vmem>>, vector<8x256xf32>
    %11 = vector.broadcast %0 : f32 to vector<8x256xf32>
    %12 = arith.mulf %10, %11 : vector<8x256xf32>
    %13 = vector.broadcast %4 : f32 to vector<8x256xf32>
    %14 = arith.mulf %10, %13 : vector<8x256xf32>
    %c0_4 = arith.constant 0 : index
    %c256 = arith.constant 256 : index
    %15 = vector.load %arg3[%c0_4, %c256] : memref<8x1024xf32, #tpu.memory_space<vmem>>, vector<8x256xf32>
    %16 = vector.broadcast %1 : f32 to vector<8x256xf32>
    %17 = arith.mulf %15, %16 : vector<8x256xf32>
    %18 = vector.broadcast %5 : f32 to vector<8x256xf32>
    %19 = arith.mulf %15, %18 : vector<8x256xf32>
    %c0_5 = arith.constant 0 : index
    %c512 = arith.constant 512 : index
    %20 = vector.load %arg3[%c0_5, %c512] : memref<8x1024xf32, #tpu.memory_space<vmem>>, vector<8x256xf32>
    %21 = vector.broadcast %2 : f32 to vector<8x256xf32>
    %22 = arith.mulf %20, %21 : vector<8x256xf32>
    %23 = vector.broadcast %6 : f32 to vector<8x256xf32>
    %24 = arith.mulf %20, %23 : vector<8x256xf32>
    %25 = arith.addf %12, %22 : vector<8x256xf32>
    %26 = arith.addf %14, %24 : vector<8x256xf32>
    %c0_6 = arith.constant 0 : index
    %c768 = arith.constant 768 : index
    %27 = vector.load %arg3[%c0_6, %c768] : memref<8x1024xf32, #tpu.memory_space<vmem>>, vector<8x256xf32>
    %28 = vector.broadcast %3 : f32 to vector<8x256xf32>
    %29 = arith.mulf %27, %28 : vector<8x256xf32>
    %30 = vector.broadcast %7 : f32 to vector<8x256xf32>
    %31 = arith.mulf %27, %30 : vector<8x256xf32>
    %32 = arith.addf %17, %29 : vector<8x256xf32>
    %33 = arith.addf %19, %31 : vector<8x256xf32>
    %34 = arith.addf %25, %32 : vector<8x256xf32>
    %35 = vector.broadcast %8 : f32 to vector<8x256xf32>
    %36 = arith.addf %34, %35 : vector<8x256xf32>
    %37 = arith.addf %26, %33 : vector<8x256xf32>
    %38 = vector.broadcast %9 : f32 to vector<8x256xf32>
    %39 = arith.addf %37, %38 : vector<8x256xf32>
    %40 = arith.negf %36 : vector<8x256xf32>
    %41 = math.exp %40 : vector<8x256xf32>
    %cst = arith.constant 1.000000e+00 : f32
    %42 = vector.broadcast %cst : f32 to vector<8x256xf32>
    %43 = arith.addf %42, %41 : vector<8x256xf32>
    %44 = arith.divf %42, %43 : vector<8x256xf32>
    %cst_7 = arith.constant dense<0xFF800000> : vector<8xf32>
    %45 = vector.multi_reduction <maximumf>, %39, %cst_7 [1] : vector<8x256xf32> to vector<8xf32>
    %46 = vector.shape_cast %45 : vector<8xf32> to vector<8x1xf32>
    %47 = vector.broadcast %46 : vector<8x1xf32> to vector<8x256xf32>
    %48 = arith.subf %39, %47 : vector<8x256xf32>
    %49 = math.exp %48 : vector<8x256xf32>
    %50 = arith.mulf %44, %49 : vector<8x256xf32>
    %cst_8 = arith.constant dense<0.000000e+00> : vector<8xf32>
    %51 = vector.multi_reduction <add>, %50, %cst_8 [1] : vector<8x256xf32> to vector<8xf32>
    %52 = vector.shape_cast %51 : vector<8xf32> to vector<8x1xf32>
    %53 = tpu.reciprocal %52 : vector<8x1xf32> -> vector<8x1xf32>
    %c0_9 = arith.constant 0 : index
    %c0_10 = arith.constant 0 : index
    %54 = vector.load %arg3[%c0_9, %c0_10] : memref<8x1024xf32, #tpu.memory_space<vmem>>, vector<8x256xf32>
    %55 = arith.mulf %50, %54 : vector<8x256xf32>
    %cst_11 = arith.constant dense<0.000000e+00> : vector<8xf32>
    %56 = vector.multi_reduction <add>, %55, %cst_11 [1] : vector<8x256xf32> to vector<8xf32>
    %57 = vector.shape_cast %56 : vector<8xf32> to vector<8x1xf32>
    %58 = arith.mulf %57, %53 : vector<8x1xf32>
    %59 = vector.broadcast %58 : vector<8x1xf32> to vector<8x256xf32>
    %60 = arith.subf %54, %59 : vector<8x256xf32>
    %61 = arith.mulf %50, %60 : vector<8x256xf32>
    %62 = arith.mulf %61, %60 : vector<8x256xf32>
    %cst_12 = arith.constant dense<0.000000e+00> : vector<8xf32>
    %63 = vector.multi_reduction <add>, %62, %cst_12 [1] : vector<8x256xf32> to vector<8xf32>
    %64 = vector.shape_cast %63 : vector<8xf32> to vector<8x1xf32>
    %65 = arith.mulf %64, %53 : vector<8x1xf32>
    %cst_13 = arith.constant 0.000000e+00 : f32
    %66 = vector.broadcast %cst_13 : f32 to vector<8x1xf32>
    %67 = arith.maximumf %65, %66 : vector<8x1xf32>
    %cst_14 = arith.constant 9.99999974E-6 : f32
    %68 = vector.broadcast %cst_14 : f32 to vector<8x1xf32>
    %69 = arith.addf %67, %68 : vector<8x1xf32>
    %70 = math.rsqrt %69 : vector<8x1xf32>
    %71 = vector.broadcast %70 : vector<8x1xf32> to vector<8x256xf32>
    %72 = arith.mulf %60, %71 : vector<8x256xf32>
    %c0_15 = arith.constant 0 : index
    %c0_16 = arith.constant 0 : index
    %73 = vector.load %arg4[%c0_15, %c0_16] : memref<8x1024xf32, #tpu.memory_space<vmem>>, vector<8x256xf32>
    tpu.vector_store %arg4[%c0_15, %c0_16], %72 {strides = array<i32>} : memref<8x1024xf32, #tpu.memory_space<vmem>>, vector<8x256xf32>,
    %c0_17 = arith.constant 0 : index
    %c256_18 = arith.constant 256 : index
    %74 = vector.load %arg3[%c0_17, %c256_18] : memref<8x1024xf32, #tpu.memory_space<vmem>>, vector<8x256xf32>
    %75 = arith.mulf %50, %74 : vector<8x256xf32>
    %cst_19 = arith.constant dense<0.000000e+00> : vector<8xf32>
    %76 = vector.multi_reduction <add>, %75, %cst_19 [1] : vector<8x256xf32> to vector<8xf32>
    %77 = vector.shape_cast %76 : vector<8xf32> to vector<8x1xf32>
    %78 = arith.mulf %77, %53 : vector<8x1xf32>
    %79 = vector.broadcast %78 : vector<8x1xf32> to vector<8x256xf32>
    %80 = arith.subf %74, %79 : vector<8x256xf32>
    %81 = arith.mulf %50, %80 : vector<8x256xf32>
    %82 = arith.mulf %81, %80 : vector<8x256xf32>
    %cst_20 = arith.constant dense<0.000000e+00> : vector<8xf32>
    %83 = vector.multi_reduction <add>, %82, %cst_20 [1] : vector<8x256xf32> to vector<8xf32>
    %84 = vector.shape_cast %83 : vector<8xf32> to vector<8x1xf32>
    %85 = arith.mulf %84, %53 : vector<8x1xf32>
    %cst_21 = arith.constant 0.000000e+00 : f32
    %86 = vector.broadcast %cst_21 : f32 to vector<8x1xf32>
    %87 = arith.maximumf %85, %86 : vector<8x1xf32>
    %cst_22 = arith.constant 9.99999974E-6 : f32
    %88 = vector.broadcast %cst_22 : f32 to vector<8x1xf32>
    %89 = arith.addf %87, %88 : vector<8x1xf32>
    %90 = math.rsqrt %89 : vector<8x1xf32>
    %91 = vector.broadcast %90 : vector<8x1xf32> to vector<8x256xf32>
    %92 = arith.mulf %80, %91 : vector<8x256xf32>
    %c0_23 = arith.constant 0 : index
    %c256_24 = arith.constant 256 : index
    %93 = vector.load %arg4[%c0_23, %c256_24] : memref<8x1024xf32, #tpu.memory_space<vmem>>, vector<8x256xf32>
    tpu.vector_store %arg4[%c0_23, %c256_24], %92 {strides = array<i32>} : memref<8x1024xf32, #tpu.memory_space<vmem>>, vector<8x256xf32>,
    %c0_25 = arith.constant 0 : index
    %c512_26 = arith.constant 512 : index
    %94 = vector.load %arg3[%c0_25, %c512_26] : memref<8x1024xf32, #tpu.memory_space<vmem>>, vector<8x256xf32>
    %95 = arith.mulf %50, %94 : vector<8x256xf32>
    %cst_27 = arith.constant dense<0.000000e+00> : vector<8xf32>
    %96 = vector.multi_reduction <add>, %95, %cst_27 [1] : vector<8x256xf32> to vector<8xf32>
    %97 = vector.shape_cast %96 : vector<8xf32> to vector<8x1xf32>
    %98 = arith.mulf %97, %53 : vector<8x1xf32>
    %99 = vector.broadcast %98 : vector<8x1xf32> to vector<8x256xf32>
    %100 = arith.subf %94, %99 : vector<8x256xf32>
    %101 = arith.mulf %50, %100 : vector<8x256xf32>
    %102 = arith.mulf %101, %100 : vector<8x256xf32>
    %cst_28 = arith.constant dense<0.000000e+00> : vector<8xf32>
    %103 = vector.multi_reduction <add>, %102, %cst_28 [1] : vector<8x256xf32> to vector<8xf32>
    %104 = vector.shape_cast %103 : vector<8xf32> to vector<8x1xf32>
    %105 = arith.mulf %104, %53 : vector<8x1xf32>
    %cst_29 = arith.constant 0.000000e+00 : f32
    %106 = vector.broadcast %cst_29 : f32 to vector<8x1xf32>
    %107 = arith.maximumf %105, %106 : vector<8x1xf32>
    %cst_30 = arith.constant 9.99999974E-6 : f32
    %108 = vector.broadcast %cst_30 : f32 to vector<8x1xf32>
    %109 = arith.addf %107, %108 : vector<8x1xf32>
    %110 = math.rsqrt %109 : vector<8x1xf32>
    %111 = vector.broadcast %110 : vector<8x1xf32> to vector<8x256xf32>
    %112 = arith.mulf %100, %111 : vector<8x256xf32>
    %c0_31 = arith.constant 0 : index
    %c512_32 = arith.constant 512 : index
    %113 = vector.load %arg4[%c0_31, %c512_32] : memref<8x1024xf32, #tpu.memory_space<vmem>>, vector<8x256xf32>
    tpu.vector_store %arg4[%c0_31, %c512_32], %112 {strides = array<i32>} : memref<8x1024xf32, #tpu.memory_space<vmem>>, vector<8x256xf32>,
    %c0_33 = arith.constant 0 : index
    %c768_34 = arith.constant 768 : index
    %114 = vector.load %arg3[%c0_33, %c768_34] : memref<8x1024xf32, #tpu.memory_space<vmem>>, vector<8x256xf32>
    %115 = arith.mulf %50, %114 : vector<8x256xf32>
    %cst_35 = arith.constant dense<0.000000e+00> : vector<8xf32>
    %116 = vector.multi_reduction <add>, %115, %cst_35 [1] : vector<8x256xf32> to vector<8xf32>
    %117 = vector.shape_cast %116 : vector<8xf32> to vector<8x1xf32>
    %118 = arith.mulf %117, %53 : vector<8x1xf32>
    %119 = vector.broadcast %118 : vector<8x1xf32> to vector<8x256xf32>
    %120 = arith.subf %114, %119 : vector<8x256xf32>
    %121 = arith.mulf %50, %120 : vector<8x256xf32>
    %122 = arith.mulf %121, %120 : vector<8x256xf32>
    %cst_36 = arith.constant dense<0.000000e+00> : vector<8xf32>
    %123 = vector.multi_reduction <add>, %122, %cst_36 [1] : vector<8x256xf32> to vector<8xf32>
    %124 = vector.shape_cast %123 : vector<8xf32> to vector<8x1xf32>
    %125 = arith.mulf %124, %53 : vector<8x1xf32>
    %cst_37 = arith.constant 0.000000e+00 : f32
    %126 = vector.broadcast %cst_37 : f32 to vector<8x1xf32>
    %127 = arith.maximumf %125, %126 : vector<8x1xf32>
    %cst_38 = arith.constant 9.99999974E-6 : f32
    %128 = vector.broadcast %cst_38 : f32 to vector<8x1xf32>
    %129 = arith.addf %127, %128 : vector<8x1xf32>
    %130 = math.rsqrt %129 : vector<8x1xf32>
    %131 = vector.broadcast %130 : vector<8x1xf32> to vector<8x256xf32>
    %132 = arith.mulf %120, %131 : vector<8x256xf32>
    %c0_39 = arith.constant 0 : index
    %c768_40 = arith.constant 768 : index
    %133 = vector.load %arg4[%c0_39, %c768_40] : memref<8x1024xf32, #tpu.memory_space<vmem>>, vector<8x256xf32>
    tpu.vector_store %arg4[%c0_39, %c768_40], %132 {strides = array<i32>} : memref<8x1024xf32, #tpu.memory_space<vmem>>, vector<8x256xf32>,
    return
  }
  func.func @transform_0(%arg0: i32, %arg1: memref<8xf32, #tpu.memory_space<smem>>, %arg2: memref<2xf32, #tpu.memory_space<smem>>) -> (i32, i32) {
    %c0_i32 = arith.constant 0 : i32
    %c0_i32_0 = arith.constant 0 : i32
    return %arg0, %c0_i32 : i32, i32
  }
  func.func @transform_1(%arg0: i32, %arg1: memref<8xf32, #tpu.memory_space<smem>>, %arg2: memref<2xf32, #tpu.memory_space<smem>>) -> (i32, i32) {
    %c0_i32 = arith.constant 0 : i32
    %c0_i32_0 = arith.constant 0 : i32
    return %arg0, %c0_i32 : i32, i32
  }
}

</mosaic_0001>

<llo_original>
// kernel: tpu_custom_call.1
$region0: #{tpu_custom_call.1}
  #allocation0 [shape = 'u32[]', space=smem, size = 0x4, offset = 0x4, fixed_abs, tag = 'smem constant byte address 0x4 - core index']
  #allocation1 [shape = 'u32[144,128]{1,0:T(1,128)}', space=vmem, size = 0x12000, scoped, tag = 'internal scratch']
  #allocation2 [shape = 's32[1]{0}', space=sflag, size = 0x4, scoped, tag = 'scoped memory for tpu_custom_call.1']
  #allocation3 [shape = 'u8[512]{0}', space=smem, size = 0x200, scoped, tag = 'prefetched SMEM operand 0']
  #allocation4 [shape = 'u8[512]{0}', space=smem, size = 0x200, scoped, tag = 'prefetched SMEM operand 1']
  %s0 = inlined_call_operand.hbm [shape: f32[8], index: 0, kind: input, shape index: {}]
  %s1 = inlined_call_operand.vmem [shape: f32[2], index: 1, kind: input, shape index: {}]
  %s2 = inlined_call_operand.hbm [shape: f32[8,1024], index: 2, kind: input, shape index: {}]
  %s3 = inlined_call_operand.hbm [shape: f32[8,1024], index: 3, kind: output, shape index: {}]
  %s4 = sld [smem:[#allocation0]]
  $region18: #{tpu_custom_call.1} parent=0
    _
  %s6 = ssub.s32 1, %s4
  %s7 = scalar_select 0, %s6, %s4
  %9 = dma.hbm_to_smem %s0, 16, [#allocation3], [#allocation2]
  %s10 = sshll.u32 %s1, 4
  %s11 = int_to_ptr.vmem [resolvable:$true] %s10
  %13 = dma.vmem_to_smem %s11, 16, [#allocation4], [#allocation2]
  %14 = dma.done [#allocation2], 32
  %15 = sfence
  $region1: #{tpu_custom_call.1} parent=0
    #allocation5 [shape = 'u8[32768]{0}', space=vmem, size = 0x8000, scoped, tag = 'input window, operand 2, single buffered']
    #allocation6 [shape = 's32[1]{0}', space=sflag, size = 0x4, scoped, tag = 'scoped memory for tpu_custom_call.1']
    #allocation7 [shape = 's32[1]{0}', space=sflag, size = 0x4, scoped, tag = 'scoped memory for tpu_custom_call.1']
    #allocation8 [shape = 'u8[32768]{0}', space=vmem, size = 0x8000, scoped, tag = 'output window, operand 0, single buffered']
    %16 = vsyncpa [#allocation6], 0
    %17 = vsyncpa [#allocation7], 0
    // Predicated region
    $region2: #{tpu_custom_call.1} parent=1 // pred_check
      _
    $region3: #{tpu_custom_call.1} parent=1 // pred_check_branch
      %19 = sbr.rel (0) target = $region5
    $region4: #{tpu_custom_call.1} parent=1 // pred_region
      %s21 = ssub.s32 1024, 1024
      %22 = vsyncadd [#allocation6], %s21
      %s24 = sshll.u32 [#allocation5], 4
      %s25 = int_to_ptr.vmem [resolvable:$true] %s24
      %27 = dma.hbm_to_vmem [thread:$0]  %s2, 1024, %s25, [#allocation6]
    $region5: #{tpu_custom_call.1} parent=1 // pred_fallthru
      _
    // Predicated region
    $region6: #{tpu_custom_call.1} parent=1 // pred_check
      _
    $region7: #{tpu_custom_call.1} parent=1 // pred_check_branch
      %29 = sbr.rel (0) target = $region9
    $region8: #{tpu_custom_call.1} parent=1 // pred_region
      %30 = dma.done [#allocation6], 1024
    $region9: #{tpu_custom_call.1} parent=1 // pred_fallthru
      _
    %s31 = sld [smem:[#allocation3]]
    %s32 = sld [smem:[#allocation3 + $0x1]]
    %s33 = sld [smem:[#allocation3 + $0x2]]
    %s34 = sld [smem:[#allocation3 + $0x3]]
    %s35 = sld [smem:[#allocation3 + $0x4]]
    %s36 = sld [smem:[#allocation3 + $0x5]]
    %s37 = sld [smem:[#allocation3 + $0x6]]
    %s38 = sld [smem:[#allocation3 + $0x7]]
    %s39 = sld [smem:[#allocation4]]
    %s40 = sld [smem:[#allocation4 + $0x1]]
    %v41 = vld [vmem:[#allocation5] sm:$0xff]
    %v42 = vld [vmem:[#allocation5 + $0x8] sm:$0xff]
    %v43 = vstv %s31
    %v44 = vmul.f32 %v41, %v43
    %v45 = vmul.f32 %v42, %v43
    %v46 = vstv %s35
    %v47 = vmul.f32 %v41, %v46
    %v48 = vmul.f32 %v42, %v46
    %v49 = vld [vmem:[#allocation5 + $0x10] sm:$0xff]
    %v50 = vld [vmem:[#allocation5 + $0x18] sm:$0xff]
    %v51 = vstv %s32
    %v52 = vmul.f32 %v49, %v51
    %v53 = vmul.f32 %v50, %v51
    %v54 = vstv %s36
    %v55 = vmul.f32 %v49, %v54
    %v56 = vmul.f32 %v50, %v54
    %v57 = vld [vmem:[#allocation5 + $0x20] sm:$0xff]
    %v58 = vld [vmem:[#allocation5 + $0x28] sm:$0xff]
    %v59 = vstv %s33
    %v60 = vmul.f32 %v57, %v59
    %v61 = vmul.f32 %v58, %v59
    %v62 = vstv %s37
    %v63 = vmul.f32 %v57, %v62
    %v64 = vmul.f32 %v58, %v62
    %v65 = vadd.f32 %v44, %v60
    %v66 = vadd.f32 %v45, %v61
    %v67 = vadd.f32 %v47, %v63
    %v68 = vadd.f32 %v48, %v64
    %v69 = vld [vmem:[#allocation5 + $0x30] sm:$0xff]
    %v70 = vld [vmem:[#allocation5 + $0x38] sm:$0xff]
    %v71 = vstv %s34
    %v72 = vmul.f32 %v69, %v71
    %v73 = vmul.f32 %v70, %v71
    %v74 = vstv %s38
    %v75 = vmul.f32 %v69, %v74
    %v76 = vmul.f32 %v70, %v74
    %v77 = vadd.f32 %v52, %v72
    %v78 = vadd.f32 %v53, %v73
    %v79 = vadd.f32 %v55, %v75
    %v80 = vadd.f32 %v56, %v76
    %v81 = vadd.f32 %v65, %v77
    %v82 = vadd.f32 %v66, %v78
    %v83 = vstv %s39
    %v84 = vadd.f32 %v81, %v83
    %v85 = vadd.f32 %v82, %v83
    %v86 = vadd.f32 %v67, %v79
    %v87 = vadd.f32 %v68, %v80
    %v88 = vstv %s40
    %v89 = vadd.f32 %v86, %v88
    %v90 = vadd.f32 %v87, %v88
    %v91 = vxor.u32 %v84, 2147483648
    %v92 = vxor.u32 %v85, 2147483648
    %v93 = vmul.f32 %v91, 1.442695
    %v94 = vpow.pop %v93
    %v95 = vmul.f32 %v92, 1.442695
    %v96 = vpow.pop %v95
    %v97 = vadd.f32 %v94, 1.0
    %v98 = vadd.f32 %v96, 1.0
    %v99 = vrcp.pop %v97
    %v100 = vmul.f32 1.0, %v99
    %v101 = vrcp.pop %v98
    %v102 = vmul.f32 1.0, %v101
    %v103 = vmax.f32 %v89, %v90
    %104 = vmax.xlane.f32.xlu0 %v103
    %v105 = vpop.xlane.xlu0 %104
    %v106 = vsub.f32 %v89, %v105
    %v107 = vsub.f32 %v90, %v105
    %v108 = vmul.f32 %v106, 1.442695
    %v109 = vpow.pop %v108
    %v110 = vmul.f32 %v107, 1.442695
    %v111 = vpow.pop %v110
    %v112 = vmul.f32 %v100, %v109
    %v113 = vmul.f32 %v102, %v111
    %v114 = vadd.f32 %v112, %v113
    %115 = vadd.xlane.f32.xlu0 %v114
    %v116 = vpop.xlane.xlu0 %115
    %v117 = vrcp.pop %v116
    %v118 = vmul.f32 %v112, %v41
    %v119 = vmul.f32 %v113, %v42
    %v120 = vadd.f32 %v118, %v119
    %121 = vadd.xlane.f32.xlu0 %v120
    %v122 = vpop.xlane.xlu0 %121
    %v123 = vmul.f32 %v122, %v117
    %v124 = vsub.f32 %v41, %v123
    %v125 = vsub.f32 %v42, %v123
    %v126 = vmul.f32 %v112, %v124
    %v127 = vmul.f32 %v113, %v125
    %v128 = vmul.f32 %v126, %v124
    %v129 = vmul.f32 %v127, %v125
    %v130 = vadd.f32 %v128, %v129
    %131 = vadd.xlane.f32.xlu0 %v130
    %v132 = vpop.xlane.xlu0 %131
    %v133 = vmul.f32 %v132, %v117
    %v134 = vmax.f32 %v133, 0.0
    %v135 = vadd.f32 %v134, 1e-05
    %v136 = vrsqrt.pop %v135
    %v137 = vmul.f32 %v124, %v136
    %v138 = vmul.f32 %v125, %v136
    %139 = vst [vmem:[#allocation8] sm:$0xff] %v137
    %140 = vst [vmem:[#allocation8 + $0x8] sm:$0xff] %v138
    %v141 = vld [vmem:[#allocation5 + $0x10] sm:$0xff]
    %v142 = vld [vmem:[#allocation5 + $0x18] sm:$0xff]
    %v143 = vmul.f32 %v112, %v141
    %v144 = vmul.f32 %v113, %v142
    %v145 = vadd.f32 %v143, %v144
    %146 = vadd.xlane.f32.xlu0 %v145
    %v147 = vpop.xlane.xlu0 %146
    %v148 = vmul.f32 %v147, %v117
    %v149 = vsub.f32 %v141, %v148
    %v150 = vsub.f32 %v142, %v148
    %v151 = vmul.f32 %v112, %v149
    %v152 = vmul.f32 %v113, %v150
    %v153 = vmul.f32 %v151, %v149
    %v154 = vmul.f32 %v152, %v150
    %v155 = vadd.f32 %v153, %v154
    %156 = vadd.xlane.f32.xlu0 %v155
    %v157 = vpop.xlane.xlu0 %156
    %v158 = vmul.f32 %v157, %v117
    %v159 = vmax.f32 %v158, 0.0
    %v160 = vadd.f32 %v159, 1e-05
    %v161 = vrsqrt.pop %v160
    %v162 = vmul.f32 %v149, %v161
    %v163 = vmul.f32 %v150, %v161
    %164 = vst [vmem:[#allocation8 + $0x10] sm:$0xff] %v162
    %165 = vst [vmem:[#allocation8 + $0x18] sm:$0xff] %v163
    %v166 = vld [vmem:[#allocation5 + $0x20] sm:$0xff]
    %v167 = vld [vmem:[#allocation5 + $0x28] sm:$0xff]
    %v168 = vmul.f32 %v112, %v166
    %v169 = vmul.f32 %v113, %v167
    %v170 = vadd.f32 %v168, %v169
    %171 = vadd.xlane.f32.xlu0 %v170
    %v172 = vpop.xlane.xlu0 %171
    %v173 = vmul.f32 %v172, %v117
    %v174 = vsub.f32 %v166, %v173
    %v175 = vsub.f32 %v167, %v173
    %v176 = vmul.f32 %v112, %v174
    %v177 = vmul.f32 %v113, %v175
    %v178 = vmul.f32 %v176, %v174
    %v179 = vmul.f32 %v177, %v175
    %v180 = vadd.f32 %v178, %v179
    %181 = vadd.xlane.f32.xlu0 %v180
    %v182 = vpop.xlane.xlu0 %181
    %v183 = vmul.f32 %v182, %v117
    %v184 = vmax.f32 %v183, 0.0
    %v185 = vadd.f32 %v184, 1e-05
    %v186 = vrsqrt.pop %v185
    %v187 = vmul.f32 %v174, %v186
    %v188 = vmul.f32 %v175, %v186
    %189 = vst [vmem:[#allocation8 + $0x20] sm:$0xff] %v187
    %190 = vst [vmem:[#allocation8 + $0x28] sm:$0xff] %v188
    %v191 = vld [vmem:[#allocation5 + $0x30] sm:$0xff]
    %v192 = vld [vmem:[#allocation5 + $0x38] sm:$0xff]
    %v193 = vmul.f32 %v112, %v191
    %v194 = vmul.f32 %v113, %v192
    %v195 = vadd.f32 %v193, %v194
    %196 = vadd.xlane.f32.xlu0 %v195
    %v197 = vpop.xlane.xlu0 %196
    %v198 = vmul.f32 %v197, %v117
    %v199 = vsub.f32 %v191, %v198
    %v200 = vsub.f32 %v192, %v198
    %v201 = vmul.f32 %v112, %v199
    %v202 = vmul.f32 %v113, %v200
    %v203 = vmul.f32 %v201, %v199
    %v204 = vmul.f32 %v202, %v200
    %v205 = vadd.f32 %v203, %v204
    %206 = vadd.xlane.f32.xlu0 %v205
    %v207 = vpop.xlane.xlu0 %206
    %v208 = vmul.f32 %v207, %v117
    %v209 = vmax.f32 %v208, 0.0
    %v210 = vadd.f32 %v209, 1e-05
    %v211 = vrsqrt.pop %v210
    %v212 = vmul.f32 %v199, %v211
    %v213 = vmul.f32 %v200, %v211
    %214 = vst [vmem:[#allocation8 + $0x30] sm:$0xff] %v212
    %215 = vst [vmem:[#allocation8 + $0x38] sm:$0xff] %v213
    // Predicated region
    $region10: #{tpu_custom_call.1} parent=1 // pred_check
      _
    $region11: #{tpu_custom_call.1} parent=1 // pred_check_branch
      %217 = sbr.rel (0) target = $region13
    $region12: #{tpu_custom_call.1} parent=1 // pred_region
      %s219 = ssub.s32 1024, 1024
      %220 = vsyncadd [#allocation7], %s219
      %s222 = sshll.u32 [#allocation8], 4
      %s223 = int_to_ptr.vmem [resolvable:$true] %s222
      %225 = dma.vmem_to_hbm [thread:$0]  %s223, 1024, %s3, [#allocation7]
    $region13: #{tpu_custom_call.1} parent=1 // pred_fallthru
      _
    // Predicated region
    $region14: #{tpu_custom_call.1} parent=1 // pred_check
      _
    $region15: #{tpu_custom_call.1} parent=1 // pred_check_branch
      %227 = sbr.rel (0) target = $region17
    $region16: #{tpu_custom_call.1} parent=1 // pred_region
      %228 = dma.done [#allocation7], 1024
    $region17: #{tpu_custom_call.1} parent=1 // pred_fallthru
      _
    %229 = vsyncpa [#allocation6], 1
    %230 = vsyncpa [#allocation7], 1

</llo_original>
